<compile_context>
chip_gen: v5e
topology: v5e:2x2
jax: 0.10.0
libtpu: 0.0.40
codegen_flags: <defaults>
</compile_context>

<pallas_src>
import jax
import jax.numpy as jnp
from jax import lax
from jax.experimental import pallas as pl
from jax.experimental.pallas import tpu as pltpu

EPS = 1e-5      # both self.eps and BatchNorm2d default eps
K = 3           # kernel_size
PAD = K // 2


def spade_kernel(x_ref, ytaps_ref, mean_ref, rstd_ref, w_ref, out_ref):
    # x_ref:     (TM, Cx)       activation tile
    # ytaps_ref: (TM, 9*Cy)     im2col'd conditioning tile (taps folded into lanes)
    # mean_ref:  (1, Cx)        precomputed BN batch mean          (resident)
    # rstd_ref:  (1, Cx)        precomputed 1/sqrt(var + eps)      (resident)
    # w_ref:     (9*Cy, 2*Cx)   fused [gamma | beta] conv weights  (resident)
    # out_ref:   (TM, Cx)
    cx = out_ref.shape[-1]

    x = x_ref[...].astype(jnp.float32)
    x_norm = (x - mean_ref[...]) * rstd_ref[...]

    # Single MXU matmul per tile computing gamma and beta together.
    # TODO(synk): on v6e/v7x, cast ytaps/w to bf16 here (keep f32 accumulation)
    # for ~2-4x on the MXU portion; kept f32 to match the f32 reference exactly.
    gb = jnp.dot(ytaps_ref[...], w_ref[...],
                 preferred_element_type=jnp.float32)       # (TM, 2*Cx)
    gamma = gb[:, :cx]
    beta = gb[:, cx:]

    out_ref[...] = ((1.0 + gamma) * x_norm + beta).astype(out_ref.dtype)


# ----------------------------- JAX glue ------------------------------------

def nearest_upsample_nchw(y, out_hw):
    # PyTorch F.interpolate(mode='nearest'): src_idx = floor(dst_idx * in/out)
    _, _, h, w = y.shape
    H, W = out_hw
    ih = jnp.floor(jnp.arange(H) * (h / H)).astype(jnp.int32)
    iw = jnp.floor(jnp.arange(W) * (w / W)).astype(jnp.int32)
    return y[:, :, ih, :][:, :, :, iw]


def bilinear_upsample_nchw_align_corners(y, out_hw):
    # PyTorch F.interpolate(mode='bilinear', align_corners=True)
    _, _, h, w = y.shape
    H, W = out_hw
    sh = (h - 1) / (H - 1) if H > 1 else 0.0
    sw = (w - 1) / (W - 1) if W > 1 else 0.0
    fy = jnp.arange(H, dtype=jnp.float32) * sh
    fx = jnp.arange(W, dtype=jnp.float32) * sw
    y0 = jnp.floor(fy).astype(jnp.int32)
    x0 = jnp.floor(fx).astype(jnp.int32)
    y1 = jnp.minimum(y0 + 1, h - 1)
    x1 = jnp.minimum(x0 + 1, w - 1)
    wy = (fy - y0.astype(jnp.float32))[None, None, :, None]
    wx = (fx - x0.astype(jnp.float32))[None, None, None, :]
    top = y[:, :, y0, :][:, :, :, x0] * (1 - wx) + y[:, :, y0, :][:, :, :, x1] * wx
    bot = y[:, :, y1, :][:, :, :, x0] * (1 - wx) + y[:, :, y1, :][:, :, :, x1] * wx
    return top * (1 - wy) + bot * wy


def _choose_tm(M, Cx, Cy):
    # Largest sublane-aligned row tile that keeps the double-buffered streams
    # comfortably inside the scoped VMEM limit on every chip generation
    # (v5e default 16 MiB scoped, v7x 64 MiB physical).
    row_bytes = 4 * (Cx + K * K * Cy + 2 * Cx)      # f32 in + out streams per row
    budget = 8 << 20                                # ~8 MiB per buffer set
    tm = max(8, min(budget // max(row_bytes, 1), 1024, M))
    tm = max(8, (tm // 8) * 8)                      # sublane (8) alignment
    return min(tm, M)


def spade_forward(x_nchw, y_nchw, w_gamma, w_beta, *, upsample="nearest", tm=None):
    """x: (N,Cx,H,W), y: (N,Cy,h,w), w_*: (Cx,Cy,3,3) PyTorch OIHW layout."""
    N, Cx, H, W = x_nchw.shape
    Cy = y_nchw.shape[1]
    M = N * H * W
    KK = K * K

    # Upsample y to x's spatial size, go NHWC, zero-pad, im2col with the 9 taps
    # folded into the lane (channel) axis -> lane-dense (M, 9*Cy).
    if upsample == "nearest":
        y_up = nearest_upsample_nchw(y_nchw, (H, W))
    elif upsample == "bilinear":
        y_up = bilinear_upsample_nchw_align_corners(y_nchw, (H, W))
    else:
        raise ValueError(upsample)
    y_nhwc = jnp.transpose(y_up, (0, 2, 3, 1))                      # (N,H,W,Cy)
    y_pad = jnp.pad(y_nhwc, ((0, 0), (PAD, PAD), (PAD, PAD), (0, 0)))
    taps = [y_pad[:, di:di + H, dj:dj + W, :].reshape(M, Cy)
            for di in range(K) for dj in range(K)]
    y_taps = jnp.concatenate(taps, axis=-1)                         # (M, 9*Cy)

    x_flat = jnp.transpose(x_nchw, (0, 2, 3, 1)).reshape(M, Cx)     # (M, Cx)

    # BatchNorm2d(affine=False), training-mode biased batch stats — hoisted out
    # of the kernel so M can be tiled and pipelined.
    xf = x_flat.astype(jnp.float32)
    mean = jnp.mean(xf, axis=0, keepdims=True)                      # (1, Cx)
    var = jnp.mean(jnp.square(xf - mean), axis=0, keepdims=True)    # biased
    rstd = lax.rsqrt(var + EPS)                                     # (1, Cx)

    # (Cx,Cy,kh,kw) OIHW -> (kh*kw*Cy, Cx); fuse gamma|beta along output axis.
    wg = jnp.transpose(w_gamma, (2, 3, 1, 0)).reshape(KK * Cy, Cx)
    wb = jnp.transpose(w_beta, (2, 3, 1, 0)).reshape(KK * Cy, Cx)
    w_full = jnp.concatenate([wg, wb], axis=-1).astype(jnp.float32)  # (9*Cy, 2*Cx)

    if tm is None:
        tm = _choose_tm(M, Cx, Cy)
    tm = min(tm, M)
    if tm < M and tm % 8 != 0:
        tm = max(8, (tm // 8) * 8)
    grid = (pl.cdiv(M, tm),)

    out_flat = pl.pallas_call(
        spade_kernel,
        out_shape=jax.ShapeDtypeStruct((M, Cx), x_nchw.dtype),
        grid=grid,
        in_specs=[
            pl.BlockSpec((tm, Cx), lambda i: (i, 0)),           # x tile (streamed)
            pl.BlockSpec((tm, KK * Cy), lambda i: (i, 0)),      # y taps (streamed)
            pl.BlockSpec((1, Cx), lambda i: (0, 0)),            # mean  (resident)
            pl.BlockSpec((1, Cx), lambda i: (0, 0)),            # rstd  (resident)
            pl.BlockSpec((KK * Cy, 2 * Cx), lambda i: (0, 0)),  # weights (resident)
        ],
        out_specs=pl.BlockSpec((tm, Cx), lambda i: (i, 0)),
        compiler_params=pltpu.CompilerParams(
            dimension_semantics=("parallel",),                  # megacore on v7x
            vmem_limit_bytes=32 * 1024 * 1024,
        ),
    )(x_flat, y_taps, mean, rstd, w_full)

    out = out_flat.reshape(N, H, W, Cx)
    return jnp.transpose(out, (0, 3, 1, 2))                         # NCHW


def spade_ref(x, y, w_gamma, w_beta):
    """Pure-JAX reference matching the PyTorch module (training-mode BN, nearest)."""
    y_up = nearest_upsample_nchw(y, x.shape[2:])
    mean = jnp.mean(x, axis=(0, 2, 3), keepdims=True)
    var = jnp.mean((x - mean) ** 2, axis=(0, 2, 3), keepdims=True)
    x_norm = (x - mean) / jnp.sqrt(var + EPS)
    dn = ('NCHW', 'OIHW', 'NCHW')
    gamma = lax.conv_general_dilated(y_up, w_gamma, (1, 1), 'SAME',
                                     dimension_numbers=dn)
    beta = lax.conv_general_dilated(y_up, w_beta, (1, 1), 'SAME',
                                    dimension_numbers=dn)
    return (1.0 + gamma) * x_norm + beta


if __name__ == "__main__":
    key = jax.random.PRNGKey(0)
    k1, k2, k3, k4 = jax.random.split(key, 4)

    N, Cx, Cy, H, W, h, w = 2, 4, 3, 16, 16, 8, 8
    x = jax.random.normal(k1, (N, Cx, H, W), jnp.float32)
    y = jax.random.normal(k2, (N, Cy, h, w), jnp.float32)
    # Deterministic synthetic conv weights (PyTorch OIHW shape: (x_ch, y_ch, 3, 3))
    w_gamma = 0.1 * jax.random.normal(k3, (Cx, Cy, K, K), jnp.float32)
    w_beta = 0.1 * jax.random.normal(k4, (Cx, Cy, K, K), jnp.float32)

    # tm=128 exercises a real 4-step grid (M = 2*16*16 = 512) with pipelining.
    out = jax.block_until_ready(spade_forward(x, y, w_gamma, w_beta, tm=128))
    ref = spade_ref(x, y, w_gamma, w_beta)

    assert out.shape == (N, Cx, H, W), out.shape
    assert jnp.allclose(out, ref, atol=1e-4, rtol=1e-4), float(
        jnp.max(jnp.abs(out - ref)))
    print("KERNEL_OK")
</pallas_src>

<mosaic_0001>
module attributes {stable_mosaic.version = 11 : i64} {
  func.func @spade_kernel(%arg0: i32, %arg1: memref<128x4xf32, #tpu.memory_space<vmem>>, %arg2: memref<128x27xf32, #tpu.memory_space<vmem>>, %arg3: memref<1x4xf32, #tpu.memory_space<vmem>>, %arg4: memref<1x4xf32, #tpu.memory_space<vmem>>, %arg5: memref<27x8xf32, #tpu.memory_space<vmem>>, %arg6: memref<128x4xf32, #tpu.memory_space<vmem>>) attributes {dimension_semantics = [#tpu.dimension_semantics<parallel>], iteration_bounds = array<i64: 4>, scalar_prefetch = 0 : i64, scratch_operands = 0 : i64, tpu.core_type = #tpu.core_type<tc>, window_params = [{transform_indices = @transform_0, window_bounds = array<i64: 128, 4>}, {transform_indices = @transform_1, window_bounds = array<i64: 128, 27>}, {pipeline_mode = #tpu.pipeline_mode<synchronous>, transform_indices = @transform_2, window_bounds = array<i64: 1, 4>}, {pipeline_mode = #tpu.pipeline_mode<synchronous>, transform_indices = @transform_3, window_bounds = array<i64: 1, 4>}, {pipeline_mode = #tpu.pipeline_mode<synchronous>, transform_indices = @transform_4, window_bounds = array<i64: 27, 8>}, {transform_indices = @transform_5, window_bounds = array<i64: 128, 4>}]} {
    %c0 = arith.constant 0 : index
    %c0_0 = arith.constant 0 : index
    %0 = vector.load %arg1[%c0, %c0_0] : memref<128x4xf32, #tpu.memory_space<vmem>>, vector<128x4xf32>
    %c0_1 = arith.constant 0 : index
    %c0_2 = arith.constant 0 : index
    %1 = vector.load %arg3[%c0_1, %c0_2] : memref<1x4xf32, #tpu.memory_space<vmem>>, vector<1x4xf32>
    %2 = vector.broadcast %1 : vector<1x4xf32> to vector<128x4xf32>
    %3 = arith.subf %0, %2 : vector<128x4xf32>
    %c0_3 = arith.constant 0 : index
    %c0_4 = arith.constant 0 : index
    %4 = vector.load %arg4[%c0_3, %c0_4] : memref<1x4xf32, #tpu.memory_space<vmem>>, vector<1x4xf32>
    %5 = vector.broadcast %4 : vector<1x4xf32> to vector<128x4xf32>
    %6 = arith.mulf %3, %5 : vector<128x4xf32>
    %c0_5 = arith.constant 0 : index
    %c0_6 = arith.constant 0 : index
    %7 = vector.load %arg2[%c0_5, %c0_6] : memref<128x27xf32, #tpu.memory_space<vmem>>, vector<128x27xf32>
    %c0_7 = arith.constant 0 : index
    %c0_8 = arith.constant 0 : index
    %8 = vector.load %arg5[%c0_7, %c0_8] : memref<27x8xf32, #tpu.memory_space<vmem>>, vector<27x8xf32>
    %cst = arith.constant dense<0.000000e+00> : vector<128x8xf32>
    %9 = tpu.matmul %7, %8, %cst {dimension_numbers = #tpu.dot_dimension_numbers<[1], [0], [0], [1], [0, 0, 1, 1], [], []>} : vector<128x27xf32>, vector<27x8xf32>, vector<128x8xf32> -> vector<128x8xf32>
    %10 = vector.extract_strided_slice %9 {offsets = [0, 0], sizes = [128, 4], strides = [1, 1]} : vector<128x8xf32> to vector<128x4xf32>
    %11 = vector.extract_strided_slice %9 {offsets = [0, 4], sizes = [128, 4], strides = [1, 1]} : vector<128x8xf32> to vector<128x4xf32>
    %cst_9 = arith.constant 1.000000e+00 : f32
    %12 = vector.broadcast %cst_9 : f32 to vector<128x4xf32>
    %13 = arith.addf %12, %10 : vector<128x4xf32>
    %14 = arith.mulf %13, %6 : vector<128x4xf32>
    %15 = arith.addf %14, %11 : vector<128x4xf32>
    %c0_10 = arith.constant 0 : index
    %c0_11 = arith.constant 0 : index
    %16 = vector.load %arg6[%c0_10, %c0_11] : memref<128x4xf32, #tpu.memory_space<vmem>>, vector<128x4xf32>
    tpu.vector_store %arg6[%c0_10, %c0_11], %15 {strides = array<i32>} : memref<128x4xf32, #tpu.memory_space<vmem>>, vector<128x4xf32>,
    return
  }
  func.func @transform_0(%arg0: i32) -> (i32, i32) {
    %c0_i32 = arith.constant 0 : i32
    %c0_i32_0 = arith.constant 0 : i32
    return %arg0, %c0_i32 : i32, i32
  }
  func.func @transform_1(%arg0: i32) -> (i32, i32) {
    %c0_i32 = arith.constant 0 : i32
    %c0_i32_0 = arith.constant 0 : i32
    return %arg0, %c0_i32 : i32, i32
  }
  func.func @transform_2(%arg0: i32) -> (i32, i32) {
    %c0_i32 = arith.constant 0 : i32
    %c0_i32_0 = arith.constant 0 : i32
    %c0_i32_1 = arith.constant 0 : i32
    return %c0_i32, %c0_i32_0 : i32, i32
  }
  func.func @transform_3(%arg0: i32) -> (i32, i32) {
    %c0_i32 = arith.constant 0 : i32
    %c0_i32_0 = arith.constant 0 : i32
    %c0_i32_1 = arith.constant 0 : i32
    return %c0_i32, %c0_i32_0 : i32, i32
  }
  func.func @transform_4(%arg0: i32) -> (i32, i32) {
    %c0_i32 = arith.constant 0 : i32
    %c0_i32_0 = arith.constant 0 : i32
    %c0_i32_1 = arith.constant 0 : i32
    return %c0_i32, %c0_i32_0 : i32, i32
  }
  func.func @transform_5(%arg0: i32) -> (i32, i32) {
    %c0_i32 = arith.constant 0 : i32
    %c0_i32_0 = arith.constant 0 : i32
    return %arg0, %c0_i32 : i32, i32
  }
}

</mosaic_0001>

<llo_original>
// kernel: tpu_custom_call.1
$region0: #{tpu_custom_call.1}
  #allocation0 [shape = 'u32[]', space=smem, size = 0x4, offset = 0x4, fixed_abs, tag = 'smem constant byte address 0x4 - core index']
  #allocation1 [shape = 'u32[72,128]{1,0:T(1,128)}', space=vmem, size = 0x9000, scoped, tag = 'internal scratch']
  %s0 = inlined_call_operand.vmem [shape: f32[512,4], index: 0, kind: input, shape index: {}]
  %s1 = inlined_call_operand.vmem [shape: f32[512,27], index: 1, kind: input, shape index: {}]
  %s2 = inlined_call_operand.vmem [shape: f32[1,4], index: 2, kind: input, shape index: {}]
  %s3 = inlined_call_operand.vmem [shape: f32[1,4], index: 3, kind: input, shape index: {}]
  %s4 = inlined_call_operand.vmem [shape: f32[27,8], index: 4, kind: input, shape index: {}]
  %s5 = inlined_call_operand.vmem [shape: f32[512,4], index: 5, kind: output, shape index: {}]
  %s6 = sld [smem:[#allocation0]]
  $region53: #{tpu_custom_call.1} parent=0
    _
  %s8 = ssub.s32 1, %s6
  %s9 = scalar_select 0, %s8, %s6
  loop: start=0, step=1, limit=6
  $region2: #{tpu_custom_call.1} parent=0 // loop_pre_header
    _
  $region3: #{tpu_custom_call.1} parent=0 // loop_header
    %s11 = sphi 0, %s15
    %p12 = scmp.ge.s32.totalorder %s11, 6
    %s21 = sphi 0, %s23
    %s24 = sphi 0, %s21
    %s25 = sphi 0, %s24
    %s41 = sphi 0, %s25
    %s47 = sphi 0, %s49
    %s50 = sphi 0, %s47
    %s51 = sphi 0, %s50
    %s67 = sphi 0, %s51
    %s71 = sphi 0, %s71
    %s73 = sphi 0, %s71
    %s74 = sphi 0, %s73
    %s88 = sphi 0, %s74
    %s92 = sphi 0, %s92
    %s94 = sphi 0, %s92
    %s95 = sphi 0, %s94
    %s109 = sphi 0, %s95
    %s113 = sphi 0, %s113
    %s115 = sphi 0, %s113
    %s116 = sphi 0, %s115
    %s130 = sphi 0, %s116
    %s136 = sphi 0, %s138
    %s139 = sphi 0, %s136
    %s140 = sphi 0, %s139
    %s156 = sphi 0, %s140
  $region4: #{tpu_custom_call.1} parent=0 // loop_header_branch
    %14 = sbr.rel (%p12) target = $region8
  $region5: #{tpu_custom_call.1} parent=0 // loop_body
    %s16 = ssub.s32 %s11, 1
    %s17 = ssub.s32 %s11, 2
    %s18 = sadd.s32 %s11, 1
    %s19 = ssub.s32 %s11, %s18
    %p20 = scmp.eq.s32.totalorder %s19, 0
    %s22 = sadd.s32 %s21, 1
    %s23 = scalar_select %p20, %s21, %s22
    %p26 = pneg %p20
    %p27 = scmp.eq.s32.totalorder %s11, 3
    %p28 = por %p26, %p27
    %p29 = scmp.ne.s32.totalorder %s21, %s24
    %p30 = scmp.eq.s32.totalorder %s11, 0
    %p31 = por %p29, %p30
    %p32 = scmp.ne.s32.totalorder %s21, %s24
    %p33 = scmp.eq.s32.totalorder %s16, 3
    %p34 = por %p32, %p33
    %p35 = scmp.ne.s32.totalorder %s24, %s25
    %p36 = scmp.eq.s32.totalorder %s16, 0
    %p37 = por %p35, %p36
    %p38 = scmp.ne.s32.totalorder %s24, %s25
    %p39 = scmp.eq.s32.totalorder %s17, 3
    %p40 = por %p38, %p39
    %p42 = scmp.ne.s32.totalorder %s25, %s41
    %p43 = scmp.eq.s32.totalorder %s17, 0
    %p44 = por %p42, %p43
    %s45 = ssub.s32 %s11, %s18
    %p46 = scmp.eq.s32.totalorder %s45, 0
    %s48 = sadd.s32 %s47, 1
    %s49 = scalar_select %p46, %s47, %s48
    %p52 = pneg %p46
    %p53 = scmp.eq.s32.totalorder %s11, 3
    %p54 = por %p52, %p53
    %p55 = scmp.ne.s32.totalorder %s47, %s50
    %p56 = scmp.eq.s32.totalorder %s11, 0
    %p57 = por %p55, %p56
    %p58 = scmp.ne.s32.totalorder %s47, %s50
    %p59 = scmp.eq.s32.totalorder %s16, 3
    %p60 = por %p58, %p59
    %p61 = scmp.ne.s32.totalorder %s50, %s51
    %p62 = scmp.eq.s32.totalorder %s16, 0
    %p63 = por %p61, %p62
    %p64 = scmp.ne.s32.totalorder %s50, %s51
    %p65 = scmp.eq.s32.totalorder %s17, 3
    %p66 = por %p64, %p65
    %p68 = scmp.ne.s32.totalorder %s51, %s67
    %p69 = scmp.eq.s32.totalorder %s17, 0
    %p70 = por %p68, %p69
    %s72 = sadd.s32 %s71, 1
    %p75 = scmp.eq.s32.totalorder %s11, 3
    %p76 = scmp.ne.s32.totalorder %s71, %s73
    %p77 = scmp.eq.s32.totalorder %s11, 0
    %p78 = por %p76, %p77
    %p79 = scmp.ne.s32.totalorder %s71, %s73
    %p80 = scmp.eq.s32.totalorder %s16, 3
    %p81 = por %p79, %p80
    %p82 = scmp.ne.s32.totalorder %s73, %s74
    %p83 = scmp.eq.s32.totalorder %s16, 0
    %p84 = por %p82, %p83
    %p85 = scmp.ne.s32.totalorder %s73, %s74
    %p86 = scmp.eq.s32.totalorder %s17, 3
    %p87 = por %p85, %p86
    %p89 = scmp.ne.s32.totalorder %s74, %s88
    %p90 = scmp.eq.s32.totalorder %s17, 0
    %p91 = por %p89, %p90
    %s93 = sadd.s32 %s92, 1
    %p96 = scmp.eq.s32.totalorder %s11, 3
    %p97 = scmp.ne.s32.totalorder %s92, %s94
    %p98 = scmp.eq.s32.totalorder %s11, 0
    %p99 = por %p97, %p98
    %p100 = scmp.ne.s32.totalorder %s92, %s94
    %p101 = scmp.eq.s32.totalorder %s16, 3
    %p102 = por %p100, %p101
    %p103 = scmp.ne.s32.totalorder %s94, %s95
    %p104 = scmp.eq.s32.totalorder %s16, 0
    %p105 = por %p103, %p104
    %p106 = scmp.ne.s32.totalorder %s94, %s95
    %p107 = scmp.eq.s32.totalorder %s17, 3
    %p108 = por %p106, %p107
    %p110 = scmp.ne.s32.totalorder %s95, %s109
    %p111 = scmp.eq.s32.totalorder %s17, 0
    %p112 = por %p110, %p111
    %s114 = sadd.s32 %s113, 1
    %p117 = scmp.eq.s32.totalorder %s11, 3
    %p118 = scmp.ne.s32.totalorder %s113, %s115
    %p119 = scmp.eq.s32.totalorder %s11, 0
    %p120 = por %p118, %p119
    %p121 = scmp.ne.s32.totalorder %s113, %s115
    %p122 = scmp.eq.s32.totalorder %s16, 3
    %p123 = por %p121, %p122
    %p124 = scmp.ne.s32.totalorder %s115, %s116
    %p125 = scmp.eq.s32.totalorder %s16, 0
    %p126 = por %p124, %p125
    %p127 = scmp.ne.s32.totalorder %s115, %s116
    %p128 = scmp.eq.s32.totalorder %s17, 3
    %p129 = por %p127, %p128
    %p131 = scmp.ne.s32.totalorder %s116, %s130
    %p132 = scmp.eq.s32.totalorder %s17, 0
    %p133 = por %p131, %p132
    %s134 = ssub.s32 %s11, %s18
    %p135 = scmp.eq.s32.totalorder %s134, 0
    %s137 = sadd.s32 %s136, 1
    %s138 = scalar_select %p135, %s136, %s137
    %p141 = pneg %p135
    %p142 = scmp.eq.s32.totalorder %s11, 3
    %p143 = por %p141, %p142
    %p144 = scmp.ne.s32.totalorder %s136, %s139
    %p145 = scmp.eq.s32.totalorder %s11, 0
    %p146 = por %p144, %p145
    %p147 = scmp.ne.s32.totalorder %s136, %s139
    %p148 = scmp.eq.s32.totalorder %s16, 3
    %p149 = por %p147, %p148
    %p150 = scmp.ne.s32.totalorder %s139, %s140
    %p151 = scmp.eq.s32.totalorder %s16, 0
    %p152 = por %p150, %p151
    %p153 = scmp.ne.s32.totalorder %s139, %s140
    %p154 = scmp.eq.s32.totalorder %s17, 3
    %p155 = por %p153, %p154
    %p157 = scmp.ne.s32.totalorder %s140, %s156
    %p158 = scmp.eq.s32.totalorder %s17, 0
    %p159 = por %p157, %p158
    %p160 = scmp.le.s32.totalorder 1, %s11
    %p161 = scmp.lt.s32.totalorder %s11, 5
    %p162 = pnand %p160, %p161
    %p163 = pneg %p162
    // Predicated region
    $region9: #{tpu_custom_call.1} parent=5 // pred_check
      _
    $region10: #{tpu_custom_call.1} parent=5 // pred_check_branch
      %165 = sbr.rel (%p162) target = $region12
    $region11: #{tpu_custom_call.1} parent=5 // pred_region
      %s166 = ssub.s32 %s11, 1
      // Predicated region
      $region13: #{tpu_custom_call.1} parent=11 // pred_check
        %p167 = pneg %p84
      $region14: #{tpu_custom_call.1} parent=11 // pred_check_branch
        %169 = sbr.rel (%p167) target = $region16
      $region15: #{tpu_custom_call.1} parent=11 // pred_region
        _
      $region16: #{tpu_custom_call.1} parent=11 // pred_fallthru
        _
      // Predicated region
      $region17: #{tpu_custom_call.1} parent=11 // pred_check
        %p170 = pneg %p105
      $region18: #{tpu_custom_call.1} parent=11 // pred_check_branch
        %172 = sbr.rel (%p170) target = $region20
      $region19: #{tpu_custom_call.1} parent=11 // pred_region
        _
      $region20: #{tpu_custom_call.1} parent=11 // pred_fallthru
        _
      // Predicated region
      $region21: #{tpu_custom_call.1} parent=11 // pred_check
        %p173 = pneg %p126
      $region22: #{tpu_custom_call.1} parent=11 // pred_check_branch
        %175 = sbr.rel (%p173) target = $region24
      $region23: #{tpu_custom_call.1} parent=11 // pred_region
        _
      $region24: #{tpu_custom_call.1} parent=11 // pred_fallthru
        _
    $region12: #{tpu_custom_call.1} parent=5 // pred_fallthru
      _
    %p176 = scmp.lt.s32.totalorder %s11, 4
    // Predicated region
    $region25: #{tpu_custom_call.1} parent=5 // pred_check
      %p177 = pneg %p176
    $region26: #{tpu_custom_call.1} parent=5 // pred_check_branch
      %179 = sbr.rel (%p177) target = $region28
    $region27: #{tpu_custom_call.1} parent=5 // pred_region
      // Predicated region
      $region29: #{tpu_custom_call.1} parent=27 // pred_check
        %p180 = pneg %p31
      $region30: #{tpu_custom_call.1} parent=27 // pred_check_branch
        %182 = sbr.rel (%p180) target = $region32
      $region31: #{tpu_custom_call.1} parent=27 // pred_region
        %s183 = smul.u32 16, %s11
        %p184 = scmp.lt.s32.totalorder %s183, 63
        %s185 = scalar_select %p184, %s183, 63
        %s186 = smul.addr %s185, 8
        %s187 = scalar_lea.vmem %s0, %s186
        %s188 = smul.u32 16, %s11
      $region32: #{tpu_custom_call.1} parent=27 // pred_fallthru
        _
      // Predicated region
      $region33: #{tpu_custom_call.1} parent=27 // pred_check
        %p189 = pneg %p57
      $region34: #{tpu_custom_call.1} parent=27 // pred_check_branch
        %191 = sbr.rel (%p189) target = $region36
      $region35: #{tpu_custom_call.1} parent=27 // pred_region
        %s192 = smul.u32 16, %s11
        %p193 = scmp.lt.s32.totalorder %s192, 63
        %s194 = scalar_select %p193, %s192, 63
        %s195 = smul.addr %s194, 8
        %s196 = scalar_lea.vmem %s1, %s195
        %s197 = smul.u32 16, %s11
      $region36: #{tpu_custom_call.1} parent=27 // pred_fallthru
        _
    $region28: #{tpu_custom_call.1} parent=5 // pred_fallthru
      _
    %p198 = scmp.le.s32.totalorder 1, %s11
    %p199 = scmp.lt.s32.totalorder %s11, 5
    %p200 = pnand %p198, %p199
    %p201 = pneg %p200
    // Predicated region
    $region37: #{tpu_custom_call.1} parent=5 // pred_check
      _
    $region38: #{tpu_custom_call.1} parent=5 // pred_check_branch
      %203 = sbr.rel (%p200) target = $region40
    $region39: #{tpu_custom_call.1} parent=5 // pred_region
      %s204 = ssub.s32 %s11, 1
      %s205 = smul.u32 16, %s16
      %p206 = scmp.lt.s32.totalorder %s205, 63
      %s207 = scalar_select %p206, %s205, 63
      %s208 = smul.addr %s207, 8
      %s209 = scalar_lea.vmem %s0, %s208
      %p210 = pneg %p37
      %p211 = pneg %p34
      %s212 = smul.u32 16, %s16
      %p213 = scmp.lt.s32.totalorder %s212, 63
      %s214 = scalar_select %p213, %s212, 63
      %s215 = smul.addr %s214, 8
      %s216 = scalar_lea.vmem %s1, %s215
      %p217 = pneg %p63
      %p218 = pneg %p60
      %p219 = pneg %p84
      %p220 = pneg %p81
      %p221 = pneg %p105
      %p222 = pneg %p102
      %p223 = pneg %p126
      %p224 = pneg %p123
      %p225 = pneg %p152
      %p226 = pneg %p149
      %s227 = smul.u32 16, %s16
      %p228 = scmp.lt.s32.totalorder %s227, 63
      %s229 = scalar_select %p228, %s227, 63
      %s230 = smul.addr %s229, 8
      %s231 = scalar_lea.vmem %s5, %s230
      %s232 = smul.u32 16, %s16
      %p233 = scmp.lt.s32.totalorder %s232, 63
      %s234 = scalar_select %p233, %s232, 63
      %s235 = smul.addr %s234, 8
      %s236 = scalar_lea.vmem %s0, %s235
      %s237 = smul.u32 16, %s16
      %s238 = smul.u32 16, %s16
      %p239 = scmp.lt.s32.totalorder %s238, 63
      %s240 = scalar_select %p239, %s238, 63
      %s241 = smul.addr %s240, 8
      %s242 = scalar_lea.vmem %s1, %s241
      %s243 = smul.u32 16, %s16
      %s244 = smul.u32 16, %s16
      %p245 = scmp.lt.s32.totalorder %s244, 63
      %s246 = scalar_select %p245, %s244, 63
      %s247 = smul.addr %s246, 8
      %s248 = scalar_lea.vmem %s5, %s247
      %s249 = smul.u32 16, %s16
      %v250 = vld [vmem:[%s236] sm:$0xff]
      %v251 = vld [vmem:[%s236 + $0x8] sm:$0xff]
      %v252 = vld [vmem:[%s236 + $0x10] sm:$0xff]
      %v253 = vld [vmem:[%s236 + $0x18] sm:$0xff]
      %v254 = vld [vmem:[%s236 + $0x20] sm:$0xff]
      %v255 = vld [vmem:[%s236 + $0x28] sm:$0xff]
      %v256 = vld [vmem:[%s236 + $0x30] sm:$0xff]
      %v257 = vld [vmem:[%s236 + $0x38] sm:$0xff]
      %v258 = vld [vmem:[%s236 + $0x40] sm:$0xff]
      %v259 = vld [vmem:[%s236 + $0x48] sm:$0xff]
      %v260 = vld [vmem:[%s236 + $0x50] sm:$0xff]
      %v261 = vld [vmem:[%s236 + $0x58] sm:$0xff]
      %v262 = vld [vmem:[%s236 + $0x60] sm:$0xff]
      %v263 = vld [vmem:[%s236 + $0x68] sm:$0xff]
      %v264 = vld [vmem:[%s236 + $0x70] sm:$0xff]
      %v265 = vld [vmem:[%s236 + $0x78] sm:$0xff]
      %v266 = vld [vmem:[%s2] sm:$0x1]
      %v268 = vperm.slane %v266, 0
      %v270 = vsub.f32 %v250, %v268
      %v271 = vsub.f32 %v251, %v268
      %v272 = vsub.f32 %v252, %v268
      %v273 = vsub.f32 %v253, %v268
      %v274 = vsub.f32 %v254, %v268
      %v275 = vsub.f32 %v255, %v268
      %v276 = vsub.f32 %v256, %v268
      %v277 = vsub.f32 %v257, %v268
      %v278 = vsub.f32 %v258, %v268
      %v279 = vsub.f32 %v259, %v268
      %v280 = vsub.f32 %v260, %v268
      %v281 = vsub.f32 %v261, %v268
      %v282 = vsub.f32 %v262, %v268
      %v283 = vsub.f32 %v263, %v268
      %v284 = vsub.f32 %v264, %v268
      %v285 = vsub.f32 %v265, %v268
      %v286 = vld [vmem:[%s3] sm:$0x1]
      %v288 = vperm.slane %v286, 0
      %v290 = vmul.f32 %v270, %v288
      %v291 = vmul.f32 %v271, %v288
      %v292 = vmul.f32 %v272, %v288
      %v293 = vmul.f32 %v273, %v288
      %v294 = vmul.f32 %v274, %v288
      %v295 = vmul.f32 %v275, %v288
      %v296 = vmul.f32 %v276, %v288
      %v297 = vmul.f32 %v277, %v288
      %v298 = vmul.f32 %v278, %v288
      %v299 = vmul.f32 %v279, %v288
      %v300 = vmul.f32 %v280, %v288
      %v301 = vmul.f32 %v281, %v288
      %v302 = vmul.f32 %v282, %v288
      %v303 = vmul.f32 %v283, %v288
      %v304 = vmul.f32 %v284, %v288
      %v305 = vmul.f32 %v285, %v288
      %v306 = vld [vmem:[%s242] sm:$0xff]
      %v307 = vld [vmem:[%s242 + $0x8] sm:$0xff]
      %v308 = vld [vmem:[%s242 + $0x10] sm:$0xff]
      %v309 = vld [vmem:[%s242 + $0x18] sm:$0xff]
      %v310 = vld [vmem:[%s242 + $0x20] sm:$0xff]
      %v311 = vld [vmem:[%s242 + $0x28] sm:$0xff]
      %v312 = vld [vmem:[%s242 + $0x30] sm:$0xff]
      %v313 = vld [vmem:[%s242 + $0x38] sm:$0xff]
      %v314 = vld [vmem:[%s242 + $0x40] sm:$0xff]
      %v315 = vld [vmem:[%s242 + $0x48] sm:$0xff]
      %v316 = vld [vmem:[%s242 + $0x50] sm:$0xff]
      %v317 = vld [vmem:[%s242 + $0x58] sm:$0xff]
      %v318 = vld [vmem:[%s242 + $0x60] sm:$0xff]
      %v319 = vld [vmem:[%s242 + $0x68] sm:$0xff]
      %v320 = vld [vmem:[%s242 + $0x70] sm:$0xff]
      %v321 = vld [vmem:[%s242 + $0x78] sm:$0xff]
      %v322 = vld [vmem:[%s4] sm:$0xff]
      %v323 = vld [vmem:[%s4 + $0x8] sm:$0xff]
      %v324 = vld [vmem:[%s4 + $0x10] sm:$0xff]
      %v325 = vld [vmem:[%s4 + $0x18] sm:$0x7]
      %vm326 = vcmask 220160
      %v328 = vsel %vm326, %v306, 0
      %v331 = vsel %vm326, %v307, 0
      %v334 = vsel %vm326, %v308, 0
      %v337 = vsel %vm326, %v309, 0
      %v340 = vsel %vm326, %v310, 0
      %v343 = vsel %vm326, %v311, 0
      %v346 = vsel %vm326, %v312, 0
      %v349 = vsel %vm326, %v313, 0
      %v352 = vsel %vm326, %v314, 0
      %v355 = vsel %vm326, %v315, 0
      %v358 = vsel %vm326, %v316, 0
      %v361 = vsel %vm326, %v317, 0
      %v364 = vsel %vm326, %v318, 0
      %v367 = vsel %vm326, %v319, 0
      %v370 = vsel %vm326, %v320, 0
      %v373 = vsel %vm326, %v321, 0
      %vm375 = vcmask 1042432
      %v377 = vsel %vm375, %v325, 0
      %379 = vmatpush.msra.mxu0 0.0
      %380 = vmatpush.msra.mxu0 0.0
      %381 = vmatpush.msra.mxu0 0.0
      %382 = vmatpush.msra.mxu0 0.0
      %383 = vmatpush.msra.mxu0 0.0
      %384 = vmatpush.msra.mxu0 0.0
      %385 = vmatpush.msra.mxu0 0.0
      %386 = vmatpush.msra.mxu0 0.0
      %387 = vmatpush.msra.mxu0 0.0
      %388 = vmatpush.msra.mxu0 0.0
      %389 = vmatpush.msra.mxu0 0.0
      %390 = vmatpush.msra.mxu0 0.0
      %391 = vmatpush.msra.mxu0 %v377
      %392 = vmatpush.msra.mxu0 %v324
      %393 = vmatpush.msra.mxu0 %v323
      %394 = vmatpush.msra.mxu0 %v322
      %395 = vmatmul.f32.gmra.mxu0 %v328
      %v396 = vpop.f32.mrf.mxu0
      %v397 = vadd.f32 0.0, %v396
      %398 = vmatmul.f32.gmra.mxu0 %v331
      %v399 = vpop.f32.mrf.mxu0
      %v400 = vadd.f32 0.0, %v399
      %401 = vmatmul.f32.gmra.mxu0 %v334
      %v402 = vpop.f32.mrf.mxu0
      %v403 = vadd.f32 0.0, %v402
      %404 = vmatmul.f32.gmra.mxu0 %v337
      %v405 = vpop.f32.mrf.mxu0
      %v406 = vadd.f32 0.0, %v405
      %407 = vmatmul.f32.gmra.mxu0 %v340
      %v408 = vpop.f32.mrf.mxu0
      %v409 = vadd.f32 0.0, %v408
      %410 = vmatmul.f32.gmra.mxu0 %v343
      %v411 = vpop.f32.mrf.mxu0
      %v412 = vadd.f32 0.0, %v411
      %413 = vmatmul.f32.gmra.mxu0 %v346
      %v414 = vpop.f32.mrf.mxu0
      %v415 = vadd.f32 0.0, %v414
      %416 = vmatmul.f32.gmra.mxu0 %v349
      %v417 = vpop.f32.mrf.mxu0
      %v418 = vadd.f32 0.0, %v417
      %419 = vmatmul.f32.gmra.mxu0 %v352
      %v420 = vpop.f32.mrf.mxu0
      %v421 = vadd.f32 0.0, %v420
      %422 = vmatmul.f32.gmra.mxu0 %v355
      %v423 = vpop.f32.mrf.mxu0
      %v424 = vadd.f32 0.0, %v423
      %425 = vmatmul.f32.gmra.mxu0 %v358
      %v426 = vpop.f32.mrf.mxu0
      %v427 = vadd.f32 0.0, %v426
      %428 = vmatmul.f32.gmra.mxu0 %v361
      %v429 = vpop.f32.mrf.mxu0
      %v430 = vadd.f32 0.0, %v429
      %431 = vmatmul.f32.gmra.mxu0 %v364
      %v432 = vpop.f32.mrf.mxu0
      %v433 = vadd.f32 0.0, %v432
      %434 = vmatmul.f32.gmra.mxu0 %v367
      %v435 = vpop.f32.mrf.mxu0
      %v436 = vadd.f32 0.0, %v435
      %437 = vmatmul.f32.gmra.mxu0 %v370
      %v438 = vpop.f32.mrf.mxu0
      %v439 = vadd.f32 0.0, %v438
      %440 = vmatmul.f32.gmra.mxu0 %v373
      %v441 = vpop.f32.mrf.mxu0
      %v442 = vadd.f32 0.0, %v441
      %443 = vdwg.mxu0
      %v444 = vadd.f32 %v397, 1.0
      %v445 = vadd.f32 %v400, 1.0
      %v446 = vadd.f32 %v403, 1.0
      %v447 = vadd.f32 %v406, 1.0
      %v448 = vadd.f32 %v409, 1.0
      %v449 = vadd.f32 %v412, 1.0
      %v450 = vadd.f32 %v415, 1.0
      %v451 = vadd.f32 %v418, 1.0
      %v452 = vadd.f32 %v421, 1.0
      %v453 = vadd.f32 %v424, 1.0
      %v454 = vadd.f32 %v427, 1.0
      %v455 = vadd.f32 %v430, 1.0
      %v456 = vadd.f32 %v433, 1.0
      %v457 = vadd.f32 %v436, 1.0
      %v458 = vadd.f32 %v439, 1.0
      %v459 = vadd.f32 %v442, 1.0
      %v460 = vmul.f32 %v444, %v290
      %v461 = vmul.f32 %v445, %v291
      %v462 = vmul.f32 %v446, %v292
      %v463 = vmul.f32 %v447, %v293
      %v464 = vmul.f32 %v448, %v294
      %v465 = vmul.f32 %v449, %v295
      %v466 = vmul.f32 %v450, %v296
      %v467 = vmul.f32 %v451, %v297
      %v468 = vmul.f32 %v452, %v298
      %v469 = vmul.f32 %v453, %v299
      %v470 = vmul.f32 %v454, %v300
      %v471 = vmul.f32 %v455, %v301
      %v472 = vmul.f32 %v456, %v302
      %v473 = vmul.f32 %v457, %v303
      %v474 = vmul.f32 %v458, %v304
      %v475 = vmul.f32 %v459, %v305
      %492 = vrot.lane.b32.xlu0 %v397, 124
      %v493 = vpop.permute.xlu0 %492
      %494 = vrot.lane.b32.xlu0 %v400, 124
      %v495 = vpop.permute.xlu0 %494
      %496 = vrot.lane.b32.xlu0 %v403, 124
      %v497 = vpop.permute.xlu0 %496
      %498 = vrot.lane.b32.xlu0 %v406, 124
      %v499 = vpop.permute.xlu0 %498
      %500 = vrot.lane.b32.xlu0 %v409, 124
      %v501 = vpop.permute.xlu0 %500
      %502 = vrot.lane.b32.xlu0 %v412, 124
      %v503 = vpop.permute.xlu0 %502
      %504 = vrot.lane.b32.xlu0 %v415, 124
      %v505 = vpop.permute.xlu0 %504
      %506 = vrot.lane.b32.xlu0 %v418, 124
      %v507 = vpop.permute.xlu0 %506
      %508 = vrot.lane.b32.xlu0 %v421, 124
      %v509 = vpop.permute.xlu0 %508
      %510 = vrot.lane.b32.xlu0 %v424, 124
      %v511 = vpop.permute.xlu0 %510
      %512 = vrot.lane.b32.xlu0 %v427, 124
      %v513 = vpop.permute.xlu0 %512
      %514 = vrot.lane.b32.xlu0 %v430, 124
      %v515 = vpop.permute.xlu0 %514
      %516 = vrot.lane.b32.xlu0 %v433, 124
      %v517 = vpop.permute.xlu0 %516
      %518 = vrot.lane.b32.xlu0 %v436, 124
      %v519 = vpop.permute.xlu0 %518
      %520 = vrot.lane.b32.xlu0 %v439, 124
      %v521 = vpop.permute.xlu0 %520
      %522 = vrot.lane.b32.xlu0 %v442, 124
      %v523 = vpop.permute.xlu0 %522
      %v540 = vadd.f32 %v460, %v493
      %v541 = vadd.f32 %v461, %v495
      %v542 = vadd.f32 %v462, %v497
      %v543 = vadd.f32 %v463, %v499
      %v544 = vadd.f32 %v464, %v501
      %v545 = vadd.f32 %v465, %v503
      %v546 = vadd.f32 %v466, %v505
      %v547 = vadd.f32 %v467, %v507
      %v548 = vadd.f32 %v468, %v509
      %v549 = vadd.f32 %v469, %v511
      %v550 = vadd.f32 %v470, %v513
      %v551 = vadd.f32 %v471, %v515
      %v552 = vadd.f32 %v472, %v517
      %v553 = vadd.f32 %v473, %v519
      %v554 = vadd.f32 %v474, %v521
      %v555 = vadd.f32 %v475, %v523
      %vm556 = vcmask 31744
      %557 = vst.msk [vmem:[%s248] sm:$0xff] %vm556, %v540
      %558 = vst.msk [vmem:[%s248 + $0x8] sm:$0xff] %vm556, %v541
      %559 = vst.msk [vmem:[%s248 + $0x10] sm:$0xff] %vm556, %v542
      %560 = vst.msk [vmem:[%s248 + $0x18] sm:$0xff] %vm556, %v543
      %561 = vst.msk [vmem:[%s248 + $0x20] sm:$0xff] %vm556, %v544
      %562 = vst.msk [vmem:[%s248 + $0x28] sm:$0xff] %vm556, %v545
      %563 = vst.msk [vmem:[%s248 + $0x30] sm:$0xff] %vm556, %v546
      %564 = vst.msk [vmem:[%s248 + $0x38] sm:$0xff] %vm556, %v547
      %565 = vst.msk [vmem:[%s248 + $0x40] sm:$0xff] %vm556, %v548
      %566 = vst.msk [vmem:[%s248 + $0x48] sm:$0xff] %vm556, %v549
      %567 = vst.msk [vmem:[%s248 + $0x50] sm:$0xff] %vm556, %v550
      %568 = vst.msk [vmem:[%s248 + $0x58] sm:$0xff] %vm556, %v551
      %569 = vst.msk [vmem:[%s248 + $0x60] sm:$0xff] %vm556, %v552
      %570 = vst.msk [vmem:[%s248 + $0x68] sm:$0xff] %vm556, %v553
      %571 = vst.msk [vmem:[%s248 + $0x70] sm:$0xff] %vm556, %v554
      %572 = vst.msk [vmem:[%s248 + $0x78] sm:$0xff] %vm556, %v555
      %s573 = smul.u32 16, %s16
      %p574 = scmp.lt.s32.totalorder %s573, 63
      %s575 = scalar_select %p574, %s573, 63
      %s576 = smul.addr %s575, 8
      %s577 = scalar_lea.vmem %s5, %s576
      // Predicated region
      $region41: #{tpu_custom_call.1} parent=39 // pred_check
        %p578 = pneg %p149
      $region42: #{tpu_custom_call.1} parent=39 // pred_check_branch
        %580 = sbr.rel (%p578) target = $region44
      $region43: #{tpu_custom_call.1} parent=39 // pred_region
        %s581 = smul.u32 16, %s16
      $region44: #{tpu_custom_call.1} parent=39 // pred_fallthru
        _
    $region40: #{tpu_custom_call.1} parent=5 // pred_fallthru
      _
    %p582 = scmp.le.s32.totalorder 2, %s11
    // Predicated region
    $region45: #{tpu_custom_call.1} parent=5 // pred_check
      %p583 = pneg %p582
    $region46: #{tpu_custom_call.1} parent=5 // pred_check_branch
      %585 = sbr.rel (%p583) target = $region48
    $region47: #{tpu_custom_call.1} parent=5 // pred_region
      %s586 = ssub.s32 %s11, 2
      // Predicated region
      $region49: #{tpu_custom_call.1} parent=47 // pred_check
        %p587 = pneg %p155
      $region50: #{tpu_custom_call.1} parent=47 // pred_check_branch
        %589 = sbr.rel (%p587) target = $region52
      $region51: #{tpu_custom_call.1} parent=47 // pred_region
        %s590 = smul.u32 16, %s17
        %p591 = scmp.lt.s32.totalorder %s590, 63
        %s592 = scalar_select %p591, %s590, 63
        %s593 = smul.addr %s592, 8
        %s594 = scalar_lea.vmem %s5, %s593
      $region52: #{tpu_custom_call.1} parent=47 // pred_fallthru
        _
    $region48: #{tpu_custom_call.1} parent=5 // pred_fallthru
      _
  $region6: #{tpu_custom_call.1} parent=0 // loop_footer
    %s15 = sadd.s32 1, %s11
  $region7: #{tpu_custom_call.1} parent=0 // loop_footer_branch
    %10 = sbr.rel target = $region3
  $region8: #{tpu_custom_call.1} parent=0 // loop_exit
    _

</llo_original>
